<compile_context>
chip_gen: v7x
topology: tpu7x:2x2x1
jax: 0.10.0
libtpu: 0.0.40
codegen_flags: <defaults>
</compile_context>

<pallas_src>
import functools

import jax
import jax.numpy as jnp
from jax.experimental import pallas as pl
from jax.experimental.pallas import tpu as pltpu


def _round_up(x, m):
    return ((x + m - 1) // m) * m


# --------------------------------------------------------------------------- adapter kernel

def _adapter_kernel(lw_ref, x_ref, w_ref, b_ref, m_ref, o_ref, *, n_layers):
    # weighted CLIP-layer reduction on the VPU (single MXU pass instead of n_layers passes),
    # fused bias + mask multiply.  lw lives in SMEM (scalars).
    xf = lw_ref[0] * x_ref[0]
    for n in range(1, n_layers):
        xf = xf + lw_ref[n] * x_ref[n]
    y = jnp.dot(xf, w_ref[...], preferred_element_type=jnp.float32) + b_ref[...]
    o_ref[...] = y * m_ref[...]


def adapter_project(x, lw, w, b, mask, tm_max=256):
    """x: (N_LAYERS, M, K), lw: (N_LAYERS,), w: (K, D), b: (D,), mask: (M,) -> (M, D) f32."""
    n, M, K = x.shape
    D = w.shape[1]
    tm = M if M <= tm_max else tm_max                     # M-tiling for pipelining / 2nd TC
    grid = (pl.cdiv(M, tm),)
    # exact algebraic rewrite: sum_n lw[n]*(x[n]@W + b) == (sum_n lw[n]*x[n])@W + sum(lw)*b
    b_eff = (b.astype(jnp.float32) * jnp.sum(lw.astype(jnp.float32))).reshape(1, D)
    return pl.pallas_call(
        functools.partial(_adapter_kernel, n_layers=n),
        out_shape=jax.ShapeDtypeStruct((M, D), jnp.float32),
        grid=grid,
        in_specs=[
            pl.BlockSpec(memory_space=pltpu.MemorySpace.SMEM),        # layer weights (scalars)
            pl.BlockSpec((n, tm, K), lambda i: (0, i, 0)),
            pl.BlockSpec((K, D), lambda i: (0, 0)),
            pl.BlockSpec((1, D), lambda i: (0, 0)),
            pl.BlockSpec((tm, 1), lambda i: (i, 0)),
        ],
        out_specs=pl.BlockSpec((tm, D), lambda i: (i, 0)),
        compiler_params=pltpu.CompilerParams(
            dimension_semantics=("parallel",),
            vmem_limit_bytes=32 * 1024 * 1024),
    )(lw.astype(jnp.float32), x.astype(jnp.float32), w.astype(jnp.float32),
      b_eff, mask.reshape(M, 1).astype(jnp.float32))


# --------------------------------------------------------------------------- pyramid + heads

def _pyramid_heads_kernel(x_ref, wl0_ref, bl0_ref, wdn_ref, bdn_ref,
                          w1_ref, b1_ref, w2c_ref, b2c_ref, w2r_ref, b2r_ref,
                          ocls_ref, ocrd_ref, *,
                          valid_lens, pad_lens, slot_offs):
    f32 = jnp.float32

    def _iota2(shape, axis):
        return jax.lax.broadcasted_iota(jnp.int32, shape, axis)

    def _shifted(v):
        """(prev, next) row-shifted copies of v with zero boundary rows (in-kernel im2col)."""
        n = v.shape[0]
        r = _iota2((n, n), 0)
        c = _iota2((n, n), 1)
        s_prev = (r == c + 1).astype(f32)          # output row i <- input row i-1
        s_next = (r == c - 1).astype(f32)          # output row i <- input row i+1
        return (jnp.dot(s_prev, v, preferred_element_type=f32),
                jnp.dot(s_next, v, preferred_element_type=f32))

    def _conv_k3(vp, vc, vn, w, b):
        """k=3 / pad=1 temporal conv over rows; w: (3*din, dout), b: (1, dout)."""
        din = vc.shape[1]
        return (jnp.dot(vp, w[:din], preferred_element_type=f32)
                + jnp.dot(vc, w[din:2 * din], preferred_element_type=f32)
                + jnp.dot(vn, w[2 * din:], preferred_element_type=f32) + b)

    def _downsample_mat(n_out_pad, n_out_valid, n_in):
        """(n_out_pad, n_in): picks even rows; rows >= n_out_valid are all-zero (padding)."""
        r = _iota2((n_out_pad, n_in), 0)
        c = _iota2((n_out_pad, n_in), 1)
        return ((c == 2 * r) & (r < n_out_valid)).astype(f32)

    x = x_ref[...]                                                   # (T, D)

    # ---- ConvPyramid: level 0 pointwise+relu, each deeper level one more stride-2 k=3 conv+relu.
    levels = [jnp.maximum(
        jnp.dot(x, wl0_ref[...], preferred_element_type=f32) + bl0_ref[...], 0.0)]
    h = x
    for i in range(1, len(valid_lens)):
        hp, hn = _shifted(h)
        y = jnp.maximum(_conv_k3(hp, h, hn, wdn_ref[i - 1], bdn_ref[i - 1]), 0.0)
        h = jnp.dot(_downsample_mat(pad_lens[i], valid_lens[i], h.shape[0]), y,
                    preferred_element_type=f32)                      # rows >= valid are exact 0
        levels.append(h)

    # ---- class + coord heads over every level, all inside this one kernel.
    w1 = w1_ref[...]                    # (3D, 2D): [class | coord] layer-1 fused along N
    b1 = b1_ref[...]                    # (1, 2D)
    w2c = w2c_ref[...]                  # (6D, 1): block-expanded (class half of hidden)
    b2c = b2c_ref[...]
    w2r = w2r_ref[...]                  # (6D, 2): block-expanded (coord half of hidden)
    b2r = b2r_ref[...]

    for i, e in enumerate(levels):
        ep, en = _shifted(e)
        h1 = jnp.maximum(_conv_k3(ep, e, en, w1, b1), 0.0)           # (rows, 2D)
        if valid_lens[i] < pad_lens[i]:
            # re-zero padding rows so the second conv sees true zero padding at the level end.
            row_ok = _iota2((pad_lens[i], 1), 0) < valid_lens[i]
            h1 = jnp.where(row_ok, h1, 0.0)
        hp, hn = _shifted(h1)
        cls = _conv_k3(hp, h1, hn, w2c, b2c)                         # (rows, 1)
        crd = jnp.exp(_conv_k3(hp, h1, hn, w2r, b2r))                # (rows, 2) (coef in wrapper)
        off = slot_offs[i]
        rows = e.shape[0]
        ocls_ref[off:off + rows, :] = cls                            # 8-row-aligned slot starts
        ocrd_ref[off:off + rows, :] = crd
        del off, rows


def pyramid_and_heads(params, x, strides):
    """x: (T, D) -> (out_class (T_tot,1), out_coord (T_tot,2), level_lengths)."""
    T, D = x.shape
    n_levels = len(strides)

    # static level lengths of the stride-2 chain, 8-row-aligned slots in the output slab
    valid = [T]
    for _ in range(1, n_levels):
        valid.append((valid[-1] - 1) // 2 + 1)
    pads = [T] + [_round_up(v, 8) for v in valid[1:]]
    slots = [_round_up(T, 8)] + pads[1:]
    offs, acc = [], 0
    for s in slots:
        offs.append(acc)
        acc += s
    total = acc

    py, ch, rh = params["pyramid"], params["class_head"], params["coord_head"]
    f32 = jnp.float32
    wdn = jnp.stack(py["w_down"], axis=0).astype(f32)                       # (n-1, 3D, D)
    bdn = jnp.stack(py["b_down"], axis=0).astype(f32).reshape(n_levels - 1, 1, D)
    # class/coord head layer-1 fused along the output dim -> one MXU pass per level
    w1 = jnp.concatenate([ch["w1"], rh["w1"]], axis=1).astype(f32)          # (3D, 2D)
    b1 = jnp.concatenate([ch["b1"], rh["b1"]], axis=0).astype(f32).reshape(1, 2 * D)
    # layer-2 weights block-expanded to consume the fused (., 2D) hidden without lane slicing
    w2c = jnp.concatenate([ch["w2"].astype(f32).reshape(3, D, 1),
                           jnp.zeros((3, D, 1), f32)], axis=1).reshape(6 * D, 1)
    w2r = jnp.concatenate([jnp.zeros((3, D, 2), f32),
                           rh["w2"].astype(f32).reshape(3, D, 2)], axis=1).reshape(6 * D, 2)

    kernel = functools.partial(
        _pyramid_heads_kernel,
        valid_lens=tuple(valid), pad_lens=tuple(pads), slot_offs=tuple(offs))
    ocls, ocrd = pl.pallas_call(
        kernel,
        out_shape=(jax.ShapeDtypeStruct((total, 1), jnp.float32),
                   jax.ShapeDtypeStruct((total, 2), jnp.float32)),
    )(x.astype(f32),
      py["w_l0"].astype(f32), py["b_l0"].astype(f32).reshape(1, D),
      wdn, bdn, w1, b1,
      w2c, ch["b2"].astype(f32).reshape(1, 1),
      w2r, rh["b2"].astype(f32).reshape(1, 2))

    # gather the valid (unpadded) rows of every level out of the aligned slab
    idx = jnp.concatenate([offs[i] + jnp.arange(valid[i]) for i in range(n_levels)])
    out_class = jnp.take(ocls, idx, axis=0)
    coef_rows = jnp.concatenate(
        [jnp.broadcast_to(params["coef"][i], (valid[i],)) for i in range(n_levels)])
    out_coord = jnp.take(ocrd, idx, axis=0) * coef_rows[:, None]            # exp() already in-kernel
    return out_class, out_coord, valid


# --------------------------------------------------------------------------- pooling + cosine

def _pool_cosine_kernel(q_ref, m_ref, wa_ref, v_ref, o_ref):
    q = q_ref[...]                                            # (L, D)
    m = m_ref[...]                                            # (L, 1)
    # attention score via VPU reduction (a (D,1) matmul would waste the MXU)
    s = jnp.sum(q * wa_ref[...], axis=-1, keepdims=True)      # (L, 1)
    s = jnp.where(m > 0, s, -1e30)
    s = s - jnp.max(s, axis=0, keepdims=True)
    e = jnp.exp(s)
    a = e * pl.reciprocal(jnp.sum(e, axis=0, keepdims=True), approx=True)
    pooled = jnp.sum(a * q, axis=0, keepdims=True)            # (1, D) -- stays in VMEM/vregs
    v = v_ref[...]                                            # (T, D)
    num = jnp.sum(v * pooled, axis=-1, keepdims=True)
    nv = jnp.sqrt(jnp.sum(v * v, axis=-1, keepdims=True))
    nq = jnp.sqrt(jnp.sum(pooled * pooled, axis=-1, keepdims=True))
    o_ref[...] = num / jnp.maximum(nv * nq, 1e-8)


def pallas_pool_cosine(q, qmsk, w_att, v):
    """q: (L, D), qmsk: (L,), w_att: (D, 1), v: (T, D) -> (T,) cosine(video, pooled query)."""
    L, D = q.shape
    T = v.shape[0]
    out = pl.pallas_call(
        _pool_cosine_kernel,
        out_shape=jax.ShapeDtypeStruct((T, 1), jnp.float32),
    )(q.astype(jnp.float32), qmsk.reshape(L, 1).astype(jnp.float32),
      w_att.astype(jnp.float32).reshape(1, D), v.astype(jnp.float32))
    return out[:, 0]


# --------------------------------------------------------------------------- glue / points

def generate_points(level_lengths, strides):
    # TODO(synk): regression-range columns of the real PointGenerator are not consumed in test
    # mode; columns are [coord, range_lo, range_hi, stride].
    pts = []
    for t_i, s in zip(level_lengths, strides):
        coord = (jnp.arange(t_i, dtype=jnp.float32) + 0.5) * s
        pts.append(jnp.stack([coord,
                              jnp.zeros((t_i,), jnp.float32),
                              jnp.full((t_i,), 1e4, jnp.float32),
                              jnp.full((t_i,), float(s), jnp.float32)], axis=-1))
    return jnp.concatenate(pts, axis=0)


# --------------------------------------------------------------------------- forward

def r2_tuning_forward(params, data, cfg, strides=(1, 2, 4, 8),
                      max_num_moment=50, merge_cls_sal=True):
    video, query = data["video"], data["query"]
    c_v, c_q, p = cfg

    video_msk = jnp.where(jnp.isfinite(video[:, :, 0]), 1, 0)
    query_msk = jnp.where(jnp.isfinite(query[:, :, 0]), 1, 0)
    video = jnp.where(jnp.isfinite(video), video, 0.0)
    query = jnp.where(jnp.isfinite(query), query, 0.0)

    b, t = video.shape[:2]
    l = query.shape[1]
    n_layers = video.shape[2] // (p * c_v)

    # slice the CLS patch BEFORE the transpose (P x less HBM traffic than transposing all patches)
    v_cls = video.reshape(b, t, n_layers, p, c_v)[:, :, :, 0, :]
    v_cls = jnp.transpose(v_cls, (2, 0, 1, 3)).reshape(n_layers, b * t, c_v)
    q_in = jnp.transpose(query.reshape(b, l, n_layers, c_q),
                         (2, 0, 1, 3)).reshape(n_layers, b * l, c_q)

    # ---- adapter: learned softmax over CLIP layers + shared projection + mask (fused kernel)
    ad = params["adapter"]
    dims = ad["w_v"].shape[1]
    lw_v = jax.nn.softmax(ad["layer_w_v"])
    lw_q = jax.nn.softmax(ad["layer_w_q"])
    video_emb = adapter_project(v_cls, lw_v, ad["w_v"], ad["b_v"],
                                video_msk.reshape(b * t)).reshape(b, t, dims)
    query_emb = adapter_project(q_in, lw_q, ad["w_q"], ad["b_q"],
                                query_msk.reshape(b * l)).reshape(b, l, dims)

    output = {"_avg_factor": b}

    # ---- test-mode head (mode='test') ----
    assert b == 1, "batch size larger than 1 is not supported for inference"

    # fused ConvPyramid + class/coord heads: one pallas_call for all levels and both heads
    out_class, out_coord, level_lengths = pyramid_and_heads(params, video_emb[0], strides)
    out_class = out_class[None]                    # (1, T_tot, 1)
    out_coord = out_coord[None]                    # (1, T_tot, 2), exp() * coef already applied

    point = generate_points(level_lengths, strides)

    # fused masked attentive pooling + cosine similarity (pooled query never hits HBM)
    out_score = pallas_pool_cosine(query_emb[0], query_msk[0],
                                   params["pooling"]["w_att"], video_emb[0])     # (t,)

    out_class_sig = jax.nn.sigmoid(out_class)
    output["_out"] = {"label": data.get("label", [None])[0]}

    split_idx, acc = [], 0
    for ln in level_lengths[:-1]:
        acc += ln
        split_idx.append(acc)
    pyd_class = jnp.split(out_class_sig[0, :, 0], split_idx)

    saliency_levels = []
    for shape, score in zip(level_lengths, pyd_class):
        if t >= shape:
            score = jnp.repeat(score, t // shape)
            if score.shape[0] < t:
                score = jnp.concatenate(
                    [score, jnp.repeat(score[-1:], t - score.shape[0])])
        else:
            scale = shape // t
            score = jnp.max(score.reshape(t, scale), axis=-1)
        saliency_levels.append(score)
    saliency = jnp.max(jnp.stack(saliency_levels), axis=0)
    if merge_cls_sal:
        saliency = saliency * out_score
    output["_out"]["saliency"] = saliency

    boundary = out_coord[0] * jnp.array([-1.0, 1.0], jnp.float32)
    boundary = boundary * point[:, 3:4]
    boundary = boundary + point[:, 0:1]
    boundary = boundary / data["fps"][0]
    boundary = jnp.concatenate([boundary, out_class_sig[0]], axis=-1)
    inds = jnp.argsort(-out_class_sig[0, :, 0])
    boundary = boundary[inds[:max_num_moment]]
    output["_out"]["boundary"] = boundary
    return output


# --------------------------------------------------------------------------- params

def init_params(key, cfg, dims, strides, n_layers):
    c_v, c_q, _ = cfg
    keys = jax.random.split(key, 16)

    def norm(k, shape, scale=0.02):
        return scale * jax.random.normal(k, shape, dtype=jnp.float32)

    return {
        "adapter": {
            "w_v": norm(keys[0], (c_v, dims)),
            "b_v": jnp.zeros((dims,), jnp.float32),
            "w_q": norm(keys[1], (c_q, dims)),
            "b_q": jnp.zeros((dims,), jnp.float32),
            "layer_w_v": norm(keys[2], (n_layers,), scale=1.0),
            "layer_w_q": norm(keys[3], (n_layers,), scale=1.0),
        },
        "pyramid": {
            "w_l0": norm(keys[4], (dims, dims)),
            "b_l0": jnp.zeros((dims,), jnp.float32),
            "w_down": [norm(keys[5 + i], (3 * dims, dims)) for i in range(len(strides) - 1)],
            "b_down": [jnp.zeros((dims,), jnp.float32) for _ in range(len(strides) - 1)],
        },
        "pooling": {"w_att": norm(keys[8], (dims, 1))},
        "class_head": {
            "w1": norm(keys[9], (3 * dims, dims)),
            "b1": jnp.zeros((dims,), jnp.float32),
            "w2": norm(keys[10], (3 * dims, 1)),
            "b2": jnp.zeros((1,), jnp.float32),
        },
        "coord_head": {
            "w1": norm(keys[11], (3 * dims, dims)),
            "b1": jnp.zeros((dims,), jnp.float32),
            "w2": norm(keys[12], (3 * dims, 2)),
            "b2": jnp.zeros((2,), jnp.float32),
        },
        "coef": jnp.ones((len(strides),), jnp.float32),   # nn.Parameter(torch.ones(len(strides)))
    }


if __name__ == "__main__":
    key = jax.random.PRNGKey(0)
    B, T, L = 1, 16, 8                        # inference requires batch == 1
    N_LAYERS, P, C_V, C_Q, DIMS = 3, 5, 32, 24, 32
    STRIDES = (1, 2, 4, 8)
    cfg = (C_V, C_Q, P)                       # (video feat dim, query feat dim, #patches)

    k1, k2, k3 = jax.random.split(key, 3)
    video = jax.random.normal(k1, (B, T, N_LAYERS * P * C_V), dtype=jnp.float32)
    query = jax.random.normal(k2, (B, L, N_LAYERS * C_Q), dtype=jnp.float32)
    data = {"video": video, "query": query, "fps": jnp.array([2.0], jnp.float32)}

    params = init_params(k3, cfg, DIMS, STRIDES, N_LAYERS)
    out = r2_tuning_forward(params, data, cfg, STRIDES)

    jax.block_until_ready(out["_out"]["saliency"])
    jax.block_until_ready(out["_out"]["boundary"])
    print("KERNEL_OK")
</pallas_src>

<mosaic_0001>
module attributes {stable_mosaic.version = 11 : i64} {
  func.func @_adapter_kernel(%arg0: i32, %arg1: memref<3xf32, #tpu.memory_space<smem>>, %arg2: memref<3x16x32xf32, #tpu.memory_space<vmem>>, %arg3: memref<32x32xf32, #tpu.memory_space<vmem>>, %arg4: memref<1x32xf32, #tpu.memory_space<vmem>>, %arg5: memref<16x1xf32, #tpu.memory_space<vmem>>, %arg6: memref<16x32xf32, #tpu.memory_space<vmem>>) attributes {dimension_semantics = [#tpu.dimension_semantics<parallel>], iteration_bounds = array<i64: 1>, scalar_prefetch = 0 : i64, scratch_operands = 0 : i64, tpu.core_type = #tpu.core_type<tc>, window_params = [{transform_indices = @transform_0, window_bounds = array<i64: 3>}, {transform_indices = @transform_1, window_bounds = array<i64: 3, 16, 32>}, {pipeline_mode = #tpu.pipeline_mode<synchronous>, transform_indices = @transform_2, window_bounds = array<i64: 32, 32>}, {pipeline_mode = #tpu.pipeline_mode<synchronous>, transform_indices = @transform_3, window_bounds = array<i64: 1, 32>}, {transform_indices = @transform_4, window_bounds = array<i64: 16, 1>}, {transform_indices = @transform_5, window_bounds = array<i64: 16, 32>}]} {
    %c0 = arith.constant 0 : index
    %0 = memref.load %arg1[%c0] : memref<3xf32, #tpu.memory_space<smem>>
    %c0_0 = arith.constant 0 : index
    %c0_1 = arith.constant 0 : index
    %c0_2 = arith.constant 0 : index
    %1 = vector.load %arg2[%c0_0, %c0_1, %c0_2] : memref<3x16x32xf32, #tpu.memory_space<vmem>>, vector<1x16x32xf32>
    %2 = vector.shape_cast %1 : vector<1x16x32xf32> to vector<16x32xf32>
    %3 = vector.broadcast %0 : f32 to vector<16x32xf32>
    %4 = arith.mulf %3, %2 : vector<16x32xf32>
    %c1 = arith.constant 1 : index
    %5 = memref.load %arg1[%c1] : memref<3xf32, #tpu.memory_space<smem>>
    %c1_3 = arith.constant 1 : index
    %c0_4 = arith.constant 0 : index
    %c0_5 = arith.constant 0 : index
    %6 = vector.load %arg2[%c1_3, %c0_4, %c0_5] : memref<3x16x32xf32, #tpu.memory_space<vmem>>, vector<1x16x32xf32>
    %7 = vector.shape_cast %6 : vector<1x16x32xf32> to vector<16x32xf32>
    %8 = vector.broadcast %5 : f32 to vector<16x32xf32>
    %9 = arith.mulf %8, %7 : vector<16x32xf32>
    %10 = arith.addf %4, %9 : vector<16x32xf32>
    %c2 = arith.constant 2 : index
    %11 = memref.load %arg1[%c2] : memref<3xf32, #tpu.memory_space<smem>>
    %c2_6 = arith.constant 2 : index
    %c0_7 = arith.constant 0 : index
    %c0_8 = arith.constant 0 : index
    %12 = vector.load %arg2[%c2_6, %c0_7, %c0_8] : memref<3x16x32xf32, #tpu.memory_space<vmem>>, vector<1x16x32xf32>
    %13 = vector.shape_cast %12 : vector<1x16x32xf32> to vector<16x32xf32>
    %14 = vector.broadcast %11 : f32 to vector<16x32xf32>
    %15 = arith.mulf %14, %13 : vector<16x32xf32>
    %16 = arith.addf %10, %15 : vector<16x32xf32>
    %c0_9 = arith.constant 0 : index
    %c0_10 = arith.constant 0 : index
    %17 = vector.load %arg3[%c0_9, %c0_10] : memref<32x32xf32, #tpu.memory_space<vmem>>, vector<32x32xf32>
    %cst = arith.constant dense<0.000000e+00> : vector<16x32xf32>
    %18 = tpu.matmul %16, %17, %cst {dimension_numbers = #tpu.dot_dimension_numbers<[1], [0], [0], [1], [0, 0, 1, 1], [], []>} : vector<16x32xf32>, vector<32x32xf32>, vector<16x32xf32> -> vector<16x32xf32>
    %c0_11 = arith.constant 0 : index
    %c0_12 = arith.constant 0 : index
    %19 = vector.load %arg4[%c0_11, %c0_12] : memref<1x32xf32, #tpu.memory_space<vmem>>, vector<1x32xf32>
    %20 = vector.broadcast %19 : vector<1x32xf32> to vector<16x32xf32>
    %21 = arith.addf %18, %20 : vector<16x32xf32>
    %c0_13 = arith.constant 0 : index
    %c0_14 = arith.constant 0 : index
    %22 = vector.load %arg5[%c0_13, %c0_14] : memref<16x1xf32, #tpu.memory_space<vmem>>, vector<16x1xf32>
    %23 = vector.broadcast %22 : vector<16x1xf32> to vector<16x32xf32>
    %24 = arith.mulf %21, %23 : vector<16x32xf32>
    %c0_15 = arith.constant 0 : index
    %c0_16 = arith.constant 0 : index
    %25 = vector.load %arg6[%c0_15, %c0_16] : memref<16x32xf32, #tpu.memory_space<vmem>>, vector<16x32xf32>
    tpu.vector_store %arg6[%c0_15, %c0_16], %24 {strides = array<i32>} : memref<16x32xf32, #tpu.memory_space<vmem>>, vector<16x32xf32>,
    return
  }
  func.func @transform_0(%arg0: i32) -> i32 {
    %c0_i32 = arith.constant 0 : i32
    %c0_i32_0 = arith.constant 0 : i32
    return %c0_i32 : i32
  }
  func.func @transform_1(%arg0: i32) -> (i32, i32, i32) {
    %c0_i32 = arith.constant 0 : i32
    %c0_i32_0 = arith.constant 0 : i32
    %c0_i32_1 = arith.constant 0 : i32
    return %c0_i32, %arg0, %c0_i32_0 : i32, i32, i32
  }
  func.func @transform_2(%arg0: i32) -> (i32, i32) {
    %c0_i32 = arith.constant 0 : i32
    %c0_i32_0 = arith.constant 0 : i32
    %c0_i32_1 = arith.constant 0 : i32
    return %c0_i32, %c0_i32_0 : i32, i32
  }
  func.func @transform_3(%arg0: i32) -> (i32, i32) {
    %c0_i32 = arith.constant 0 : i32
    %c0_i32_0 = arith.constant 0 : i32
    %c0_i32_1 = arith.constant 0 : i32
    return %c0_i32, %c0_i32_0 : i32, i32
  }
  func.func @transform_4(%arg0: i32) -> (i32, i32) {
    %c0_i32 = arith.constant 0 : i32
    %c0_i32_0 = arith.constant 0 : i32
    return %arg0, %c0_i32 : i32, i32
  }
  func.func @transform_5(%arg0: i32) -> (i32, i32) {
    %c0_i32 = arith.constant 0 : i32
    %c0_i32_0 = arith.constant 0 : i32
    return %arg0, %c0_i32 : i32, i32
  }
}

</mosaic_0001>

<llo_original>
// kernel: tpu_custom_call.1
$region0: #{tpu_custom_call.1}
  #allocation0 [shape = 'u32[]', space=smem, size = 0x4, offset = 0x4, fixed_abs, tag = 'smem constant byte address 0x4 - core index']
  #allocation1 [shape = 'u32[144,128]{1,0:T(1,128)}', space=vmem, size = 0x12000, scoped, tag = 'internal scratch']
  %s0 = inlined_call_operand.vmem [shape: f32[3], index: 0, kind: input, shape index: {}]
  %s1 = inlined_call_operand.hbm [shape: f32[3,16,32], index: 1, kind: input, shape index: {}]
  %s2 = inlined_call_operand.hbm [shape: f32[32,32], index: 2, kind: input, shape index: {}]
  %s3 = inlined_call_operand.vmem [shape: f32[1,32], index: 3, kind: input, shape index: {}]
  %s4 = inlined_call_operand.vmem [shape: f32[16,1], index: 4, kind: input, shape index: {}]
  %s5 = inlined_call_operand.hbm [shape: f32[16,32], index: 5, kind: output, shape index: {}]
  %s6 = sld [smem:[#allocation0]]
  $region42: #{tpu_custom_call.1} parent=0
    _
  %s8 = ssub.s32 1, %s6
  %s9 = scalar_select 0, %s8, %s6
  $region1: #{tpu_custom_call.1} parent=0
    #allocation2 [shape = 'u8[512]{0}', space=smem, size = 0x200, scoped, tag = 'input window, operand 0, single buffered']
    #allocation3 [shape = 's32[1]{0}', space=sflag, size = 0x4, scoped, tag = 'scoped memory for tpu_custom_call.1']
    #allocation4 [shape = 's32[1]{0}', space=sflag, size = 0x4, scoped, tag = 'scoped memory for tpu_custom_call.1']
    #allocation5 [shape = 's32[1]{0}', space=sflag, size = 0x4, scoped, tag = 'scoped memory for tpu_custom_call.1']
    #allocation6 [shape = 'u8[24576]{0}', space=vmem, size = 0x6000, scoped, tag = 'input window, operand 1, single buffered']
    #allocation7 [shape = 'u8[16384]{0}', space=vmem, size = 0x4000, scoped, tag = 'input window, operand 2, single buffered']
    #allocation8 [shape = 's32[1]{0}', space=sflag, size = 0x4, scoped, tag = 'scoped memory for tpu_custom_call.1']
    #allocation9 [shape = 'u8[8192]{0}', space=vmem, size = 0x2000, scoped, tag = 'output window, operand 0, single buffered']
    %10 = vsyncpa [#allocation5], 0
    %11 = vsyncpa [#allocation3], 0
    %12 = vsyncpa [#allocation8], 0
    %13 = vsyncpa [#allocation4], 0
    // Predicated region
    $region2: #{tpu_custom_call.1} parent=1 // pred_check
      _
    $region3: #{tpu_custom_call.1} parent=1 // pred_check_branch
      %15 = sbr.rel (0) target = $region5
    $region4: #{tpu_custom_call.1} parent=1 // pred_region
      %s17 = ssub.s32 16, 16
      %18 = vsyncadd [#allocation5], %s17
      %s20 = sshll.u32 %s0, 4
      %s21 = int_to_ptr.vmem [resolvable:$true] %s20
      %23 = dma.vmem_to_smem %s21, 16, [#allocation2], [#allocation5]
    $region5: #{tpu_custom_call.1} parent=1 // pred_fallthru
      _
    // Predicated region
    $region6: #{tpu_custom_call.1} parent=1 // pred_check
      _
    $region7: #{tpu_custom_call.1} parent=1 // pred_check_branch
      %25 = sbr.rel (0) target = $region9
    $region8: #{tpu_custom_call.1} parent=1 // pred_region
      %s27 = ssub.s32 768, 768
      %28 = vsyncadd [#allocation3], %s27
      %s29 = sshll.u32 [#allocation6], 4
      %s30 = int_to_ptr.vmem [resolvable:$true] %s29
      %35 = dma.hbm_to_vmem [thread:$0]  %s1, 768, %s30, [#allocation3], 128, 128, 8
    $region9: #{tpu_custom_call.1} parent=1 // pred_fallthru
      _
    // Predicated region
    $region10: #{tpu_custom_call.1} parent=1 // pred_check
      _
    $region11: #{tpu_custom_call.1} parent=1 // pred_check_branch
      %37 = sbr.rel (0) target = $region13
    $region12: #{tpu_custom_call.1} parent=1 // pred_region
      %s39 = ssub.s32 512, 512
      %40 = vsyncadd [#allocation8], %s39
      %s41 = sshll.u32 [#allocation7], 4
      %s42 = int_to_ptr.vmem [resolvable:$true] %s41
      %47 = dma.hbm_to_vmem [thread:$0]  %s2, 512, %s42, [#allocation8], 128, 128, 8
    $region13: #{tpu_custom_call.1} parent=1 // pred_fallthru
      _
    // Predicated region
    $region14: #{tpu_custom_call.1} parent=1 // pred_check
      _
    $region15: #{tpu_custom_call.1} parent=1 // pred_check_branch
      %49 = sbr.rel (0) target = $region17
    $region16: #{tpu_custom_call.1} parent=1 // pred_region
      _
    $region17: #{tpu_custom_call.1} parent=1 // pred_fallthru
      _
    // Predicated region
    $region18: #{tpu_custom_call.1} parent=1 // pred_check
      _
    $region19: #{tpu_custom_call.1} parent=1 // pred_check_branch
      %51 = sbr.rel (0) target = $region21
    $region20: #{tpu_custom_call.1} parent=1 // pred_region
      _
    $region21: #{tpu_custom_call.1} parent=1 // pred_fallthru
      _
    // Predicated region
    $region22: #{tpu_custom_call.1} parent=1 // pred_check
      _
    $region23: #{tpu_custom_call.1} parent=1 // pred_check_branch
      %53 = sbr.rel (0) target = $region25
    $region24: #{tpu_custom_call.1} parent=1 // pred_region
      %54 = dma.done [#allocation5], 16
    $region25: #{tpu_custom_call.1} parent=1 // pred_fallthru
      _
    // Predicated region
    $region26: #{tpu_custom_call.1} parent=1 // pred_check
      _
    $region27: #{tpu_custom_call.1} parent=1 // pred_check_branch
      %56 = sbr.rel (0) target = $region29
    $region28: #{tpu_custom_call.1} parent=1 // pred_region
      %57 = dma.done [#allocation3], 768
    $region29: #{tpu_custom_call.1} parent=1 // pred_fallthru
      _
    // Predicated region
    $region30: #{tpu_custom_call.1} parent=1 // pred_check
      _
    $region31: #{tpu_custom_call.1} parent=1 // pred_check_branch
      %59 = sbr.rel (0) target = $region33
    $region32: #{tpu_custom_call.1} parent=1 // pred_region
      %60 = dma.done [#allocation8], 512
    $region33: #{tpu_custom_call.1} parent=1 // pred_fallthru
      _
    %61 = sfence
    %s62 = sld [smem:[#allocation2]]
    %v63 = vld [vmem:[#allocation6] sm:$0xff]
    %v64 = vld [vmem:[#allocation6 + $0x8] sm:$0xff]
    %v65 = vstv %s62
    %v66 = vmul.f32 %v65, %v63
    %v67 = vmul.f32 %v65, %v64
    %s68 = sld [smem:[#allocation2 + $0x1]]
    %s69 = scalar_lea.vmem [#allocation6], 16
    %v70 = vld [vmem:[%s69] sm:$0xff]
    %v71 = vld [vmem:[%s69 + $0x8] sm:$0xff]
    %v72 = vstv %s68
    %v73 = vmul.f32 %v72, %v70
    %v74 = vmul.f32 %v72, %v71
    %v75 = vadd.f32 %v66, %v73
    %v76 = vadd.f32 %v67, %v74
    %s77 = sld [smem:[#allocation2 + $0x2]]
    %s78 = scalar_lea.vmem [#allocation6], 32
    %v79 = vld [vmem:[%s78] sm:$0xff]
    %v80 = vld [vmem:[%s78 + $0x8] sm:$0xff]
    %v81 = vstv %s77
    %v82 = vmul.f32 %v81, %v79
    %v83 = vmul.f32 %v81, %v80
    %v84 = vadd.f32 %v75, %v82
    %v85 = vadd.f32 %v76, %v83
    %v86 = vld [vmem:[#allocation7] sm:$0xff]
    %v87 = vld [vmem:[#allocation7 + $0x8] sm:$0xff]
    %v88 = vld [vmem:[#allocation7 + $0x10] sm:$0xff]
    %v89 = vld [vmem:[#allocation7 + $0x18] sm:$0xff]
    %v90 = vld [vmem:[%s3] sm:$0x1]
    %v92 = vlaneseq
    %v93 = vshrl.u32 %v92, 7
    %v94 = vsub.s32 0, %v93
    %v95 = vrot.slane %v90, %v94
    %vm97 = vcmask 261120
    %v99 = vsel %vm97, %v84, 0
    %v102 = vsel %vm97, %v85, 0
    %104 = vmatprep.subr.mxu0 0.0
    %105 = vmatpush1.msra.mxu0 %v86
    %106 = vmatprep.subr.mxu0 0.0
    %107 = vmatpush1.msra.mxu0 %v87
    %108 = vmatprep.subr.mxu0 0.0
    %109 = vmatpush1.msra.mxu0 %v88
    %110 = vmatprep.subr.mxu0 0.0
    %111 = vmatpush1.msra.mxu0 %v89
    %112 = vmatprep.subr.mxu0 0.0
    %113 = vmatpush1.msra.mxu0 0.0
    %114 = vmatprep.subr.mxu0 0.0
    %115 = vmatpush1.msra.mxu0 0.0
    %116 = vmatprep.subr.mxu0 0.0
    %117 = vmatpush1.msra.mxu0 0.0
    %118 = vmatprep.subr.mxu0 0.0
    %119 = vmatpush1.msra.mxu0 0.0
    %120 = vmatprep.subr.mxu0 0.0
    %121 = vmatpush1.msra.mxu0 0.0
    %122 = vmatprep.subr.mxu0 0.0
    %123 = vmatpush1.msra.mxu0 0.0
    %124 = vmatprep.subr.mxu0 0.0
    %125 = vmatpush1.msra.mxu0 0.0
    %126 = vmatprep.subr.mxu0 0.0
    %127 = vmatpush1.msra.mxu0 0.0
    %128 = vmatprep.subr.mxu0 0.0
    %129 = vmatpush1.msra.mxu0 0.0
    %130 = vmatprep.subr.mxu0 0.0
    %131 = vmatpush1.msra.mxu0 0.0
    %132 = vmatprep.subr.mxu0 0.0
    %133 = vmatpush1.msra.mxu0 0.0
    %134 = vmatprep.subr.mxu0 0.0
    %135 = vmatpush1.msra.mxu0 0.0
    %136 = vmatprep.subr.mxu0 0.0
    %137 = vmatpush1.msra.mxu0 0.0
    %138 = vmatprep.subr.mxu0 0.0
    %139 = vmatpush1.msra.mxu0 0.0
    %140 = vmatprep.subr.mxu0 0.0
    %141 = vmatpush1.msra.mxu0 0.0
    %142 = vmatprep.subr.mxu0 0.0
    %143 = vmatpush1.msra.mxu0 0.0
    %144 = vmatprep.subr.mxu0 0.0
    %145 = vmatpush1.msra.mxu0 0.0
    %146 = vmatprep.subr.mxu0 0.0
    %147 = vmatpush1.msra.mxu0 0.0
    %148 = vmatprep.subr.mxu0 0.0
    %149 = vmatpush1.msra.mxu0 0.0
    %150 = vmatprep.subr.mxu0 0.0
    %151 = vmatpush1.msra.mxu0 0.0
    %152 = vmatprep.subr.mxu0 0.0
    %153 = vmatpush1.msra.mxu0 0.0
    %154 = vmatprep.subr.mxu0 0.0
    %155 = vmatpush1.msra.mxu0 0.0
    %156 = vmatprep.subr.mxu0 0.0
    %157 = vmatpush1.msra.mxu0 0.0
    %158 = vmatprep.subr.mxu0 0.0
    %159 = vmatpush1.msra.mxu0 0.0
    %160 = vmatprep.subr.mxu0 0.0
    %161 = vmatpush1.msra.mxu0 0.0
    %162 = vmatprep.subr.mxu0 0.0
    %163 = vmatpush1.msra.mxu0 0.0
    %164 = vmatprep.subr.mxu0 0.0
    %165 = vmatpush1.msra.mxu0 0.0
    %166 = vmatprep.subr.mxu0 0.0
    %167 = vmatpush1.msra.mxu0 0.0
    %168 = vmatprep.mubr.f32.mxu0 0.0
    %169 = vmatmul.mubr.f32.gmra.mrb[0].mxu0 %v99
    %v170 = vpop.f32.mrb[0].mxu0
    %v171 = vadd.f32 %v95, %v170
    %v172 = vpop.f32.mrb[0].mxu0
    %173 = vmatprep.mubr.f32.mxu0 0.0
    %174 = vmatmul.mubr.f32.gmra.mrb[0].mxu0 %v102
    %v175 = vpop.f32.mrb[0].mxu0
    %v176 = vadd.f32 %v95, %v175
    %v177 = vpop.f32.mrb[0].mxu0
    %178 = vdwg.mxu0
    %v179 = vld [vmem:[%s4] sm:$0xff]
    %v180 = vld [vmem:[%s4 + $0x8] sm:$0xff]
    %182 = vset.pattern.permute.xlu0 0
    %183 = vperm.xlu0 %182, %v179
    %v184 = vpop.permute.xlu0 %183
    %187 = vset.pattern.permute.xlu0 0
    %188 = vperm.xlu0 %187, %v180
    %v189 = vpop.permute.xlu0 %188
    %v191 = vmul.f32 %v171, %v184
    %v192 = vmul.f32 %v176, %v189
    %193 = vst.msk [vmem:[#allocation9] sm:$0xff] %vm97, %v191
    %194 = vst.msk [vmem:[#allocation9 + $0x8] sm:$0xff] %vm97, %v192
    // Predicated region
    $region34: #{tpu_custom_call.1} parent=1 // pred_check
      _
    $region35: #{tpu_custom_call.1} parent=1 // pred_check_branch
      %196 = sbr.rel (0) target = $region37
    $region36: #{tpu_custom_call.1} parent=1 // pred_region
      %s198 = ssub.s32 256, 256
      %199 = vsyncadd [#allocation4], %s198
      %s200 = sshll.u32 [#allocation9], 4
      %s201 = int_to_ptr.vmem [resolvable:$true] %s200
      %206 = dma.vmem_to_hbm [thread:$0]  %s201, 256, %s5, [#allocation4], 128, 128, 8
    $region37: #{tpu_custom_call.1} parent=1 // pred_fallthru
      _
    // Predicated region
    $region38: #{tpu_custom_call.1} parent=1 // pred_check
      _
    $region39: #{tpu_custom_call.1} parent=1 // pred_check_branch
      %208 = sbr.rel (0) target = $region41
    $region40: #{tpu_custom_call.1} parent=1 // pred_region
      %209 = dma.done [#allocation4], 256
    $region41: #{tpu_custom_call.1} parent=1 // pred_fallthru
      _
    %210 = vsyncpa [#allocation3], 1
    %211 = vsyncpa [#allocation8], 1
    %212 = vsyncpa [#allocation4], 1
    %213 = vsyncpa [#allocation5], 1

</llo_original>
